<compile_context>
chip_gen: v5e
topology: v5e:2x2
jax: 0.10.0
libtpu: 0.0.40
codegen_flags: <defaults>
</compile_context>

<pallas_src>
import jax
import jax.numpy as jnp
from jax.experimental import pallas as pl
from jax.experimental.pallas import tpu as pltpu


def _round_up(x, m):
    return (x + m - 1) // m * m


def _proj_mask_kernel(x_ref, w_ref, b_ref, m_ref, o_ref):
    """Fused (x @ w + b) * mask for one (tm, N_pad) output tile.

    The full reduction (K = T5 hidden dim <= 1024) is done in one MXU dot, so
    there is no K grid axis, no accumulator scratch and no init/finalize
    branches.  x arrives f32 (saves an HBM round-trip vs wrapper pre-cast) and
    is cast to bf16 on the VPU; accumulation and the epilogue are f32.
    """
    x = x_ref[...].astype(jnp.bfloat16)
    acc = jnp.dot(x, w_ref[...], preferred_element_type=jnp.float32)
    o_ref[...] = (acc + b_ref[...]) * m_ref[...]


def t5_conditioner_project(last_hidden_state, attention_mask, w, b, *, tm=512):
    """Pallas implementation of the proj_out + mask part of T5Conditioner.forward.

    Args:
      last_hidden_state: (B, L, dim) float32 — synthetic T5 encoder output.
      attention_mask:    (B, L) bool.
      w:                 (dim, output_dim) float32  (torch Linear weight.T).
      b:                 (output_dim,) float32.
      tm:                requested M-tile size (rows of B*L per grid step).
    Returns:
      (embeddings (B, L, output_dim) float32, attention_mask (B, L) bool)
    """
    B, L, D = last_hidden_state.shape
    Dw, N = w.shape
    assert Dw == D
    M = B * L

    # --- tiling / padding -------------------------------------------------
    # Lane-dense output: pad N to a multiple of 128.
    N_pad = _round_up(N, 128)
    # tm: multiple of 8 (f32 sublanes), never larger than (padded) M.
    tm = min(_round_up(tm, 8), _round_up(M, 8))

    # Conservative VMEM estimate (double-buffer every stream).
    def vmem_bytes(tm_):
        return (2 * tm_ * D * 4          # x tiles (f32, double-buffered)
                + 2 * D * N_pad * 2      # weight (bf16, counted double-buffered)
                + 2 * tm_ * N_pad * 4    # output tiles (f32, double-buffered)
                + 2 * tm_ * 4            # mask column (f32)
                + 2 * N_pad * 4)         # bias row (f32)

    budget = 24 * 2**20                  # safe on v5e/v6e/v7x scoped VMEM
    while tm > 64 and vmem_bytes(tm) > budget:
        tm = _round_up(tm // 2, 8)

    M_pad = _round_up(M, tm)
    grid_m = M_pad // tm

    # --- operand preparation ----------------------------------------------
    # x stays f32 (cast to bf16 in-kernel); mask as an f32 column.
    x = last_hidden_state.reshape(M, D)
    mask_col = attention_mask.reshape(M, 1).astype(jnp.float32)
    if M_pad != M:
        x = jnp.pad(x, ((0, M_pad - M), (0, 0)))
        mask_col = jnp.pad(mask_col, ((0, M_pad - M), (0, 0)))

    w_bf = w.astype(jnp.bfloat16)
    b2d = b.reshape(1, N).astype(jnp.float32)
    if N_pad != N:
        w_bf = jnp.pad(w_bf, ((0, 0), (0, N_pad - N)))
        b2d = jnp.pad(b2d, ((0, 0), (0, N_pad - N)))

    # Explicit VMEM limit: at least 16 MiB, never above v7x's 64 MiB.
    vmem_limit = int(min(64 * 2**20, max(16 * 2**20, 2 * vmem_bytes(tm))))

    out = pl.pallas_call(
        _proj_mask_kernel,
        out_shape=jax.ShapeDtypeStruct((M_pad, N_pad), jnp.float32),
        grid_spec=pltpu.PrefetchScalarGridSpec(
            num_scalar_prefetch=0,
            grid=(grid_m,),
            in_specs=[
                pl.BlockSpec((tm, D), lambda i: (i, 0)),        # x tile (f32)
                pl.BlockSpec((D, N_pad), lambda i: (0, 0)),     # full weight (bf16)
                pl.BlockSpec((1, N_pad), lambda i: (0, 0)),     # bias row (f32)
                pl.BlockSpec((tm, 1), lambda i: (i, 0)),        # mask column (f32)
            ],
            out_specs=pl.BlockSpec((tm, N_pad), lambda i: (i, 0)),
        ),
        compiler_params=pltpu.CompilerParams(
            dimension_semantics=("parallel",),
            vmem_limit_bytes=vmem_limit,
        ),
    )(x, w_bf, b2d, mask_col)

    emb = out[:M, :N].reshape(B, L, N)
    return emb, attention_mask


if __name__ == "__main__":
    # Small, shape-consistent example (a "mini T5"):
    B, L = 2, 8           # batch of texts, max_length
    DIM = 256             # T5 hidden size (real t5-base = 768; shrunk)
    OUT_DIM = 128         # conditioner output_dim (project_out=True path)

    key = jax.random.PRNGKey(0)
    k_emb, k_w, k_b = jax.random.split(key, 3)

    # Synthetic T5 encoder output (stand-in for model(...)['last_hidden_state'])
    last_hidden_state = jax.random.normal(k_emb, (B, L, DIM), dtype=jnp.float32)

    # Deterministic proj_out parameters: torch nn.Linear(dim, output_dim)
    # weight is (output_dim, dim); we store its transpose for x @ W.T + b.
    w_t = jax.random.normal(k_w, (OUT_DIM, DIM), dtype=jnp.float32) * 0.02
    w = w_t.T                                        # (DIM, OUT_DIM)
    b = jax.random.normal(k_b, (OUT_DIM,), dtype=jnp.float32) * 0.02

    # Attention mask: sequences of length 5 and 8 (rest is padding).
    lengths = jnp.array([5, 8], dtype=jnp.int32)
    attention_mask = (jnp.arange(L)[None, :] < lengths[:, None])  # (B, L) bool

    emb, mask_out = t5_conditioner_project(last_hidden_state, attention_mask, w, b)
    emb = jax.block_until_ready(emb)

    # Reference check: kernel computes with bf16 matmul operands + f32
    # accumulation, so compare against the bf16-cast reference (tight tol) ...
    x32 = last_hidden_state.reshape(B * L, DIM).astype(jnp.bfloat16).astype(jnp.float32)
    w32 = w.astype(jnp.bfloat16).astype(jnp.float32)
    ref_bf16 = (x32 @ w32 + b).reshape(B, L, OUT_DIM)
    ref_bf16 = ref_bf16 * attention_mask[..., None].astype(jnp.float32)
    # ... and sanity-check against the pure f32 reference (loose tolerance).
    ref_f32 = (last_hidden_state.reshape(B * L, DIM) @ w + b).reshape(B, L, OUT_DIM)
    ref_f32 = ref_f32 * attention_mask[..., None].astype(jnp.float32)

    assert emb.shape == (B, L, OUT_DIM)
    assert mask_out.dtype == jnp.bool_
    assert jnp.allclose(emb, ref_bf16, atol=1e-3, rtol=1e-3)
    assert jnp.allclose(emb, ref_f32, atol=5e-2, rtol=5e-2)

    print("KERNEL_OK")
</pallas_src>

<mosaic_0001>
module attributes {stable_mosaic.version = 11 : i64} {
  func.func @_proj_mask_kernel(%arg0: i32, %arg1: memref<16x256xf32, #tpu.memory_space<vmem>>, %arg2: memref<256x128xbf16, #tpu.memory_space<vmem>>, %arg3: memref<1x128xf32, #tpu.memory_space<vmem>>, %arg4: memref<16x1xf32, #tpu.memory_space<vmem>>, %arg5: memref<16x128xf32, #tpu.memory_space<vmem>>) attributes {dimension_semantics = [#tpu.dimension_semantics<parallel>], iteration_bounds = array<i64: 1>, scalar_prefetch = 0 : i64, scratch_operands = 0 : i64, tpu.core_type = #tpu.core_type<tc>, window_params = [{transform_indices = @transform_0, window_bounds = array<i64: 16, 256>}, {pipeline_mode = #tpu.pipeline_mode<synchronous>, transform_indices = @transform_1, window_bounds = array<i64: 256, 128>}, {pipeline_mode = #tpu.pipeline_mode<synchronous>, transform_indices = @transform_2, window_bounds = array<i64: 1, 128>}, {transform_indices = @transform_3, window_bounds = array<i64: 16, 1>}, {transform_indices = @transform_4, window_bounds = array<i64: 16, 128>}]} {
    %c0 = arith.constant 0 : index
    %c0_0 = arith.constant 0 : index
    %0 = vector.load %arg1[%c0, %c0_0] : memref<16x256xf32, #tpu.memory_space<vmem>>, vector<16x256xf32>
    %1 = arith.truncf %0 : vector<16x256xf32> to vector<16x256xbf16>
    %c0_1 = arith.constant 0 : index
    %c0_2 = arith.constant 0 : index
    %2 = vector.load %arg2[%c0_1, %c0_2] : memref<256x128xbf16, #tpu.memory_space<vmem>>, vector<256x128xbf16>
    %cst = arith.constant dense<0.000000e+00> : vector<16x128xf32>
    %3 = tpu.matmul %1, %2, %cst {dimension_numbers = #tpu.dot_dimension_numbers<[1], [0], [0], [1], [0, 0, 1, 1], [], []>} : vector<16x256xbf16>, vector<256x128xbf16>, vector<16x128xf32> -> vector<16x128xf32>
    %c0_3 = arith.constant 0 : index
    %c0_4 = arith.constant 0 : index
    %4 = vector.load %arg3[%c0_3, %c0_4] : memref<1x128xf32, #tpu.memory_space<vmem>>, vector<1x128xf32>
    %5 = vector.broadcast %4 : vector<1x128xf32> to vector<16x128xf32>
    %6 = arith.addf %3, %5 : vector<16x128xf32>
    %c0_5 = arith.constant 0 : index
    %c0_6 = arith.constant 0 : index
    %7 = vector.load %arg4[%c0_5, %c0_6] : memref<16x1xf32, #tpu.memory_space<vmem>>, vector<16x1xf32>
    %8 = vector.broadcast %7 : vector<16x1xf32> to vector<16x128xf32>
    %9 = arith.mulf %6, %8 : vector<16x128xf32>
    %c0_7 = arith.constant 0 : index
    %c0_8 = arith.constant 0 : index
    %10 = vector.load %arg5[%c0_7, %c0_8] : memref<16x128xf32, #tpu.memory_space<vmem>>, vector<16x128xf32>
    tpu.vector_store %arg5[%c0_7, %c0_8], %9 {strides = array<i32>} : memref<16x128xf32, #tpu.memory_space<vmem>>, vector<16x128xf32>,
    return
  }
  func.func @transform_0(%arg0: i32) -> (i32, i32) {
    %c0_i32 = arith.constant 0 : i32
    %c0_i32_0 = arith.constant 0 : i32
    return %arg0, %c0_i32 : i32, i32
  }
  func.func @transform_1(%arg0: i32) -> (i32, i32) {
    %c0_i32 = arith.constant 0 : i32
    %c0_i32_0 = arith.constant 0 : i32
    %c0_i32_1 = arith.constant 0 : i32
    return %c0_i32, %c0_i32_0 : i32, i32
  }
  func.func @transform_2(%arg0: i32) -> (i32, i32) {
    %c0_i32 = arith.constant 0 : i32
    %c0_i32_0 = arith.constant 0 : i32
    %c0_i32_1 = arith.constant 0 : i32
    return %c0_i32, %c0_i32_0 : i32, i32
  }
  func.func @transform_3(%arg0: i32) -> (i32, i32) {
    %c0_i32 = arith.constant 0 : i32
    %c0_i32_0 = arith.constant 0 : i32
    return %arg0, %c0_i32 : i32, i32
  }
  func.func @transform_4(%arg0: i32) -> (i32, i32) {
    %c0_i32 = arith.constant 0 : i32
    %c0_i32_0 = arith.constant 0 : i32
    return %arg0, %c0_i32 : i32, i32
  }
}

</mosaic_0001>

<llo_original>
// kernel: tpu_custom_call.1
$region0: #{tpu_custom_call.1}
  #allocation0 [shape = 'u32[]', space=smem, size = 0x4, offset = 0x4, fixed_abs, tag = 'smem constant byte address 0x4 - core index']
  #allocation1 [shape = 'u32[72,128]{1,0:T(1,128)}', space=vmem, size = 0x9000, scoped, tag = 'internal scratch']
  %s0 = inlined_call_operand.hbm [shape: f32[16,256], index: 0, kind: input, shape index: {}]
  %s1 = inlined_call_operand.hbm [shape: bf16[256,128], index: 1, kind: input, shape index: {}]
  %s2 = inlined_call_operand.vmem [shape: f32[1,128], index: 2, kind: input, shape index: {}]
  %s3 = inlined_call_operand.vmem [shape: f32[16,1], index: 3, kind: input, shape index: {}]
  %s4 = inlined_call_operand.hbm [shape: f32[16,128], index: 4, kind: output, shape index: {}]
  %s5 = sld [smem:[#allocation0]]
  $region34: #{tpu_custom_call.1} parent=0
    _
  %s7 = ssub.s32 1, %s5
  %s8 = scalar_select 0, %s7, %s5
  $region1: #{tpu_custom_call.1} parent=0
    #allocation2 [shape = 'u8[16384]{0}', space=vmem, size = 0x4000, scoped, tag = 'input window, operand 0, single buffered']
    #allocation3 [shape = 's32[1]{0}', space=sflag, size = 0x4, scoped, tag = 'scoped memory for tpu_custom_call.1']
    #allocation4 [shape = 's32[1]{0}', space=sflag, size = 0x4, scoped, tag = 'scoped memory for tpu_custom_call.1']
    #allocation5 [shape = 'u8[65536]{0}', space=vmem, size = 0x10000, scoped, tag = 'input window, operand 1, single buffered']
    #allocation6 [shape = 's32[1]{0}', space=sflag, size = 0x4, scoped, tag = 'scoped memory for tpu_custom_call.1']
    #allocation7 [shape = 'u8[8192]{0}', space=vmem, size = 0x2000, scoped, tag = 'output window, operand 0, single buffered']
    %9 = vsyncpa [#allocation3], 0
    %10 = vsyncpa [#allocation6], 0
    %11 = vsyncpa [#allocation4], 0
    // Predicated region
    $region2: #{tpu_custom_call.1} parent=1 // pred_check
      _
    $region3: #{tpu_custom_call.1} parent=1 // pred_check_branch
      %13 = sbr.rel (0) target = $region5
    $region4: #{tpu_custom_call.1} parent=1 // pred_region
      %15 = vsyncadd [#allocation3], 0
      %s16 = sshll.u32 %s0, 4
      %s17 = int_to_ptr.hbm [resolvable:$true] %s16
      %s18 = sshll.u32 [#allocation2], 4
      %s19 = int_to_ptr.vmem [resolvable:$true] %s18
      %24 = dma.hbm_to_vmem [thread:$0]  %s17, 512, %s19, [#allocation3], 256, 256, 16
    $region5: #{tpu_custom_call.1} parent=1 // pred_fallthru
      _
    // Predicated region
    $region6: #{tpu_custom_call.1} parent=1 // pred_check
      _
    $region7: #{tpu_custom_call.1} parent=1 // pred_check_branch
      %26 = sbr.rel (0) target = $region9
    $region8: #{tpu_custom_call.1} parent=1 // pred_region
      %28 = vsyncadd [#allocation6], 0
      %s29 = sshll.u32 %s1, 4
      %s30 = int_to_ptr.hbm [resolvable:$true] %s29
      %s31 = sshll.u32 [#allocation5], 4
      %s32 = int_to_ptr.vmem [resolvable:$true] %s31
      %37 = dma.hbm_to_vmem [thread:$0]  %s30, 2048, %s32, [#allocation6], 64, 64, 4
    $region9: #{tpu_custom_call.1} parent=1 // pred_fallthru
      _
    // Predicated region
    $region10: #{tpu_custom_call.1} parent=1 // pred_check
      _
    $region11: #{tpu_custom_call.1} parent=1 // pred_check_branch
      %39 = sbr.rel (0) target = $region13
    $region12: #{tpu_custom_call.1} parent=1 // pred_region
      _
    $region13: #{tpu_custom_call.1} parent=1 // pred_fallthru
      _
    // Predicated region
    $region14: #{tpu_custom_call.1} parent=1 // pred_check
      _
    $region15: #{tpu_custom_call.1} parent=1 // pred_check_branch
      %41 = sbr.rel (0) target = $region17
    $region16: #{tpu_custom_call.1} parent=1 // pred_region
      _
    $region17: #{tpu_custom_call.1} parent=1 // pred_fallthru
      _
    // Predicated region
    $region18: #{tpu_custom_call.1} parent=1 // pred_check
      _
    $region19: #{tpu_custom_call.1} parent=1 // pred_check_branch
      %43 = sbr.rel (0) target = $region21
    $region20: #{tpu_custom_call.1} parent=1 // pred_region
      %45 = dma.done [#allocation3], 512
    $region21: #{tpu_custom_call.1} parent=1 // pred_fallthru
      _
    // Predicated region
    $region22: #{tpu_custom_call.1} parent=1 // pred_check
      _
    $region23: #{tpu_custom_call.1} parent=1 // pred_check_branch
      %47 = sbr.rel (0) target = $region25
    $region24: #{tpu_custom_call.1} parent=1 // pred_region
      %49 = dma.done [#allocation6], 2048
    $region25: #{tpu_custom_call.1} parent=1 // pred_fallthru
      _
    %v50 = vld [vmem:[#allocation2] sm:$0xff]
    %v51 = vld [vmem:[#allocation2 + $0x8] sm:$0xff]
    %v52 = vld [vmem:[#allocation2 + $0x10] sm:$0xff]
    %v53 = vld [vmem:[#allocation2 + $0x18] sm:$0xff]
    %v54 = vpack.c.bf16 %v52, %v50
    %v55 = vpack.c.bf16 %v53, %v51
    %v56 = vld [vmem:[#allocation5] sm:$0xf]
    %v57 = vld [vmem:[#allocation5 + $0x4] sm:$0xf]
    %v58 = vld [vmem:[#allocation5 + $0x8] sm:$0xf]
    %v59 = vld [vmem:[#allocation5 + $0xc] sm:$0xf]
    %v60 = vld [vmem:[#allocation5 + $0x10] sm:$0xf]
    %v61 = vld [vmem:[#allocation5 + $0x14] sm:$0xf]
    %v62 = vld [vmem:[#allocation5 + $0x18] sm:$0xf]
    %v63 = vld [vmem:[#allocation5 + $0x1c] sm:$0xf]
    %v64 = vld [vmem:[#allocation5 + $0x20] sm:$0xf]
    %v65 = vld [vmem:[#allocation5 + $0x24] sm:$0xf]
    %v66 = vld [vmem:[#allocation5 + $0x28] sm:$0xf]
    %v67 = vld [vmem:[#allocation5 + $0x2c] sm:$0xf]
    %v68 = vld [vmem:[#allocation5 + $0x30] sm:$0xf]
    %v69 = vld [vmem:[#allocation5 + $0x34] sm:$0xf]
    %v70 = vld [vmem:[#allocation5 + $0x38] sm:$0xf]
    %v71 = vld [vmem:[#allocation5 + $0x3c] sm:$0xf]
    %v72 = vld [vmem:[#allocation5 + $0x40] sm:$0xf]
    %v73 = vld [vmem:[#allocation5 + $0x44] sm:$0xf]
    %v74 = vld [vmem:[#allocation5 + $0x48] sm:$0xf]
    %v75 = vld [vmem:[#allocation5 + $0x4c] sm:$0xf]
    %v76 = vld [vmem:[#allocation5 + $0x50] sm:$0xf]
    %v77 = vld [vmem:[#allocation5 + $0x54] sm:$0xf]
    %v78 = vld [vmem:[#allocation5 + $0x58] sm:$0xf]
    %v79 = vld [vmem:[#allocation5 + $0x5c] sm:$0xf]
    %v80 = vld [vmem:[#allocation5 + $0x60] sm:$0xf]
    %v81 = vld [vmem:[#allocation5 + $0x64] sm:$0xf]
    %v82 = vld [vmem:[#allocation5 + $0x68] sm:$0xf]
    %v83 = vld [vmem:[#allocation5 + $0x6c] sm:$0xf]
    %v84 = vld [vmem:[#allocation5 + $0x70] sm:$0xf]
    %v85 = vld [vmem:[#allocation5 + $0x74] sm:$0xf]
    %v86 = vld [vmem:[#allocation5 + $0x78] sm:$0xf]
    %v87 = vld [vmem:[#allocation5 + $0x7c] sm:$0xf]
    %v88 = vld [vmem:[%s2] sm:$0x1]
    %v90 = vperm.slane %v88, 0
    %v124 = vunpack.c.l.b16 %v56
    %v125 = vunpack.c.l.b16 %v57
    %v126 = vunpack.c.l.b16 %v58
    %v127 = vunpack.c.l.b16 %v59
    %v128 = vunpack.c.l.b16 %v60
    %v129 = vunpack.c.l.b16 %v61
    %v130 = vunpack.c.l.b16 %v62
    %v131 = vunpack.c.l.b16 %v63
    %v132 = vunpack.c.l.b16 %v64
    %v133 = vunpack.c.l.b16 %v65
    %v134 = vunpack.c.l.b16 %v66
    %v135 = vunpack.c.l.b16 %v67
    %v136 = vunpack.c.l.b16 %v68
    %v137 = vunpack.c.l.b16 %v69
    %v138 = vunpack.c.l.b16 %v70
    %v139 = vunpack.c.l.b16 %v71
    %v140 = vunpack.c.l.b16 %v72
    %v141 = vunpack.c.l.b16 %v73
    %v142 = vunpack.c.l.b16 %v74
    %v143 = vunpack.c.l.b16 %v75
    %v144 = vunpack.c.l.b16 %v76
    %v145 = vunpack.c.l.b16 %v77
    %v146 = vunpack.c.l.b16 %v78
    %v147 = vunpack.c.l.b16 %v79
    %v148 = vunpack.c.l.b16 %v80
    %v149 = vunpack.c.l.b16 %v81
    %v150 = vunpack.c.l.b16 %v82
    %v151 = vunpack.c.l.b16 %v83
    %v152 = vunpack.c.l.b16 %v84
    %v153 = vunpack.c.l.b16 %v85
    %v154 = vunpack.c.l.b16 %v86
    %v155 = vunpack.c.l.b16 %v87
    %v156 = vpack.c.b16 %v125, %v124
    %v157 = vpack.c.b16 %v127, %v126
    %v158 = vpack.c.b16 %v129, %v128
    %v159 = vpack.c.b16 %v131, %v130
    %v160 = vpack.c.b16 %v133, %v132
    %v161 = vpack.c.b16 %v135, %v134
    %v162 = vpack.c.b16 %v137, %v136
    %v163 = vpack.c.b16 %v139, %v138
    %v164 = vpack.c.b16 %v141, %v140
    %v165 = vpack.c.b16 %v143, %v142
    %v166 = vpack.c.b16 %v145, %v144
    %v167 = vpack.c.b16 %v147, %v146
    %v168 = vpack.c.b16 %v149, %v148
    %v169 = vpack.c.b16 %v151, %v150
    %v170 = vpack.c.b16 %v153, %v152
    %v171 = vpack.c.b16 %v155, %v154
    %188 = vmatpush.bf16.msra.mxu0 %v163
    %189 = vmatpush.bf16.msra.mxu0 %v162
    %190 = vmatpush.bf16.msra.mxu0 %v161
    %191 = vmatpush.bf16.msra.mxu0 %v160
    %192 = vmatpush.bf16.msra.mxu0 %v159
    %193 = vmatpush.bf16.msra.mxu0 %v158
    %194 = vmatpush.bf16.msra.mxu0 %v157
    %195 = vmatpush.bf16.msra.mxu0 %v156
    %196 = vmatmul.bf16.gmra.mxu0 %v54
    %v197 = vpop.f32.mrf.mxu0
    %v198 = vadd.f32 %v90, %v197
    %v199 = vpop.f32.mrf.mxu0
    %v200 = vadd.f32 %v90, %v199
    %201 = vdwg.mxu0
    %202 = vmatpush.bf16.msra.mxu0 %v171
    %203 = vmatpush.bf16.msra.mxu0 %v170
    %204 = vmatpush.bf16.msra.mxu0 %v169
    %205 = vmatpush.bf16.msra.mxu0 %v168
    %206 = vmatpush.bf16.msra.mxu0 %v167
    %207 = vmatpush.bf16.msra.mxu0 %v166
    %208 = vmatpush.bf16.msra.mxu0 %v165
    %209 = vmatpush.bf16.msra.mxu0 %v164
    %210 = vmatmul.bf16.gmra.mxu0 %v55
    %v211 = vpop.f32.mrf.mxu0
    %v212 = vadd.f32 %v198, %v211
    %v213 = vpop.f32.mrf.mxu0
    %v214 = vadd.f32 %v200, %v213
    %215 = vdwg.mxu0
    %v216 = vld [vmem:[%s3] sm:$0xff]
    %v217 = vld [vmem:[%s3 + $0x8] sm:$0xff]
    %219 = vset.pattern.permute.xlu0 0
    %220 = vperm.xlu0 %219, %v216
    %v221 = vpop.permute.xlu0 %220
    %224 = vset.pattern.permute.xlu0 0
    %225 = vperm.xlu0 %224, %v217
    %v226 = vpop.permute.xlu0 %225
    %v228 = vmul.f32 %v212, %v221
    %v229 = vmul.f32 %v214, %v226
    %230 = vst [vmem:[#allocation7] sm:$0xff] %v228
    %231 = vst [vmem:[#allocation7 + $0x8] sm:$0xff] %v229
    // Predicated region
    $region26: #{tpu_custom_call.1} parent=1 // pred_check
      _
    $region27: #{tpu_custom_call.1} parent=1 // pred_check_branch
      %233 = sbr.rel (0) target = $region29
    $region28: #{tpu_custom_call.1} parent=1 // pred_region
      %235 = vsyncadd [#allocation4], 0
      %s236 = sshll.u32 [#allocation7], 4
      %s237 = int_to_ptr.vmem [resolvable:$true] %s236
      %s238 = sshll.u32 %s4, 4
      %s239 = int_to_ptr.hbm [resolvable:$true] %s238
      %244 = dma.vmem_to_hbm [thread:$0]  %s237, 256, %s239, [#allocation4], 128, 128, 8
    $region29: #{tpu_custom_call.1} parent=1 // pred_fallthru
      _
    // Predicated region
    $region30: #{tpu_custom_call.1} parent=1 // pred_check
      _
    $region31: #{tpu_custom_call.1} parent=1 // pred_check_branch
      %246 = sbr.rel (0) target = $region33
    $region32: #{tpu_custom_call.1} parent=1 // pred_region
      %248 = dma.done [#allocation4], 256
    $region33: #{tpu_custom_call.1} parent=1 // pred_fallthru
      _
    %249 = vsyncpa [#allocation3], 1
    %250 = vsyncpa [#allocation6], 1
    %251 = vsyncpa [#allocation4], 1

</llo_original>
